<compile_context>
chip_gen: v6e
topology: v6e:2x2x1
jax: 0.10.0
libtpu: 0.0.40
codegen_flags: <defaults>
</compile_context>

<pallas_src>
import math
import jax
import jax.numpy as jnp
from jax.experimental import pallas as pl
from jax.experimental.pallas import tpu as pltpu

_LANE = 128
_SUBLANE = 8


def _round_up(x, m):
    return ((x + m - 1) // m) * m


def _choose_block_m(batch):
    """Batch tile: large enough to amortize per-grid-step overhead and fill the MXU
    M dimension, but keep >= 2 grid steps (v7x megacore) whenever possible."""
    bm = min(512, _round_up(batch, _SUBLANE))
    if batch > _SUBLANE and pl.cdiv(batch, bm) == 1:
        bm = _round_up(pl.cdiv(batch, 2), _SUBLANE)
    return bm


def make_genonet_kernel(num_linear, compute_dtype):
    """Fused MLP for one batch tile.

    Ref order: x, W0, b0, W1, b1, ..., Wf, bf, out.
    Layers 0..num_linear-2 are Linear+ReLU; the last is Linear followed by tanh.
    Weights are stored (in_dim, out_dim) so each layer is y = x @ W + b.
    """

    def kernel(x_ref, *refs):
        out_ref = refs[-1]
        params = refs[:-1]

        h = x_ref[...]
        if h.dtype != compute_dtype:
            h = h.astype(compute_dtype)

        # Hidden layers: Linear + ReLU (f32 MXU accumulation, f32 epilogue on the VPU).
        for li in range(num_linear - 1):
            w = params[2 * li][...]
            b = params[2 * li + 1][...]
            y = jnp.dot(h, w, preferred_element_type=jnp.float32) + b
            h = jnp.maximum(y, 0.0)
            if compute_dtype != jnp.float32:
                h = h.astype(compute_dtype)

        # Final layer: Linear, then final_fun = tanh (lane-padded output block).
        wf = params[-2][...]
        bf = params[-1][...]
        y = jnp.dot(h, wf, preferred_element_type=jnp.float32) + bf
        out_ref[...] = jnp.tanh(y).astype(out_ref.dtype)

    return kernel


def genonet_forward(x, params, *, block_m=None, compute_dtype=jnp.float32):
    """params: list of (W, b) with W shape (in_dim, out_dim), b shape (1, out_dim)."""
    batch, in_dim = x.shape
    out_dim = params[-1][0].shape[1]
    num_linear = len(params)

    if block_m is None:
        block_m = _choose_block_m(batch)

    # Lane-dense output: pad the final layer's out-features to a multiple of 128.
    out_pad = _round_up(out_dim, _LANE)
    wf, bf = params[-1]
    if out_pad != out_dim:
        wf = jnp.pad(wf, ((0, 0), (0, out_pad - out_dim)))
        bf = jnp.pad(bf, ((0, 0), (0, out_pad - out_dim)))
    work_params = list(params[:-1]) + [(wf, bf)]

    flat = []
    for w, b in work_params:
        if compute_dtype != jnp.float32:
            w = w.astype(compute_dtype)  # halve weight DMA/VMEM (v6e/v7x)
        flat.append(w)
        flat.append(b.astype(jnp.float32))  # bias added in f32 epilogue

    grid = (pl.cdiv(batch, block_m),)

    # Advisory cost hint for the XLA scheduler around the custom call.
    hidden_dims = [w.shape[1] for w, _ in work_params]
    flops = 0
    prev = in_dim
    for hd in hidden_dims:
        flops += 2 * batch * prev * hd
        prev = hd
    bytes_accessed = (x.size * x.dtype.itemsize
                      + sum(int(a.size) * a.dtype.itemsize for a in flat)
                      + batch * out_pad * 4)
    cost = pl.CostEstimate(flops=int(flops),
                           transcendentals=int(batch * out_pad),
                           bytes_accessed=int(bytes_accessed))

    # Scoped-VMEM budget: resident weights + double-buffered x/out tiles +
    # activation head-room, clamped to a cross-chip-safe range (v7x has 64 MiB).
    weight_bytes = sum(int(a.size) * a.dtype.itemsize for a in flat)
    io_bytes = 2 * block_m * in_dim * 4 + 2 * block_m * out_pad * 4
    act_bytes = 4 * block_m * max(hidden_dims + [in_dim]) * 4
    vmem_limit = int(min(56 * 1024 * 1024,
                         max(16 * 1024 * 1024,
                             2 * (weight_bytes + io_bytes + act_bytes))))

    kernel = make_genonet_kernel(num_linear, compute_dtype)
    out_shape = jax.ShapeDtypeStruct((batch, out_pad), jnp.float32)
    x_spec = pl.BlockSpec((block_m, in_dim), lambda i: (i, 0))
    out_spec = pl.BlockSpec((block_m, out_pad), lambda i: (i, 0))
    # Whole-array VMEM-resident weights/biases: DMA'd once, not re-fetched per step.
    weight_specs = [pl.BlockSpec(memory_space=pltpu.MemorySpace.VMEM) for _ in flat]

    padded = pl.pallas_call(
        kernel,
        out_shape=out_shape,
        grid=grid,
        in_specs=[x_spec] + weight_specs,
        out_specs=out_spec,
        compiler_params=pltpu.CompilerParams(
            dimension_semantics=("parallel",),
            vmem_limit_bytes=vmem_limit),
        cost_estimate=cost,
    )(x, *flat)

    return padded[:, :out_dim] if out_pad != out_dim else padded


def kaiming_uniform(key, in_dim, out_dim):
    # nn.init.kaiming_uniform_(w, nonlinearity='relu'):
    # gain = sqrt(2), bound = gain * sqrt(3 / fan_in) = sqrt(6 / in_dim)
    bound = math.sqrt(6.0 / in_dim)
    return jax.random.uniform(key, (in_dim, out_dim), jnp.float32, -bound, bound)


def init_genonet_params(key, input_dim, output_dim, hidden_dim, hidden_layers):
    params = []
    dims = [(input_dim, hidden_dim)]
    dims += [(hidden_dim, hidden_dim)] * hidden_layers
    dims += [(hidden_dim, output_dim)]
    keys = jax.random.split(key, len(dims))
    for k, (din, dout) in zip(keys, dims):
        w = kaiming_uniform(k, din, dout)
        b = jnp.zeros((1, dout), jnp.float32)  # init.zeros_(bias)
        params.append((w, b))
    return params


def genonet_reference(x, params):
    """Plain-JAX reference for validation (matches the PyTorch forward)."""
    h = x
    for w, b in params[:-1]:
        h = jnp.maximum(h @ w + b, 0.0)
    wf, bf = params[-1]
    return jnp.tanh(h @ wf + bf)


if __name__ == "__main__":
    # Shapes consistent with the module: real_to_train implies input_dim=3
    # (age, longitude, latitude). batch=16, hidden_dim=32, 2 hidden layers, output_dim=3.
    # TODO(synk): batch_norm / dropout branches of create_layer are off by default and not implemented.
    input_dim, output_dim, hidden_dim, hidden_layers = 3, 3, 32, 2
    batch = 16

    key = jax.random.PRNGKey(0)
    kx, kp = jax.random.split(key)
    x = jax.random.uniform(kx, (batch, input_dim), jnp.float32, -1.0, 1.0)
    params = init_genonet_params(kp, input_dim, output_dim, hidden_dim, hidden_layers)

    out = genonet_forward(x, params)
    out = jax.block_until_ready(out)

    ref = genonet_reference(x, params)
    assert out.shape == (batch, output_dim)
    assert jnp.allclose(out, ref, atol=1e-5, rtol=1e-5), "mismatch vs reference"

    print("KERNEL_OK")
</pallas_src>

<mosaic_0001>
module attributes {stable_mosaic.version = 11 : i64} {
  func.func @kernel(%arg0: i32, %arg1: memref<8x3xf32, #tpu.memory_space<vmem>>, %arg2: memref<3x32xf32, #tpu.memory_space<vmem>>, %arg3: memref<1x32xf32, #tpu.memory_space<vmem>>, %arg4: memref<32x32xf32, #tpu.memory_space<vmem>>, %arg5: memref<1x32xf32, #tpu.memory_space<vmem>>, %arg6: memref<32x32xf32, #tpu.memory_space<vmem>>, %arg7: memref<1x32xf32, #tpu.memory_space<vmem>>, %arg8: memref<32x128xf32, #tpu.memory_space<vmem>>, %arg9: memref<1x128xf32, #tpu.memory_space<vmem>>, %arg10: memref<8x128xf32, #tpu.memory_space<vmem>>) attributes {dimension_semantics = [#tpu.dimension_semantics<parallel>], iteration_bounds = array<i64: 2>, scalar_prefetch = 0 : i64, scratch_operands = 0 : i64, tpu.core_type = #tpu.core_type<tc>, window_params = [{transform_indices = @transform_0, window_bounds = array<i64: 8, 3>}, {pipeline_mode = #tpu.pipeline_mode<synchronous>, transform_indices = @transform_1, window_bounds = array<i64: 3, 32>}, {pipeline_mode = #tpu.pipeline_mode<synchronous>, transform_indices = @transform_2, window_bounds = array<i64: 1, 32>}, {pipeline_mode = #tpu.pipeline_mode<synchronous>, transform_indices = @transform_3, window_bounds = array<i64: 32, 32>}, {pipeline_mode = #tpu.pipeline_mode<synchronous>, transform_indices = @transform_4, window_bounds = array<i64: 1, 32>}, {pipeline_mode = #tpu.pipeline_mode<synchronous>, transform_indices = @transform_5, window_bounds = array<i64: 32, 32>}, {pipeline_mode = #tpu.pipeline_mode<synchronous>, transform_indices = @transform_6, window_bounds = array<i64: 1, 32>}, {pipeline_mode = #tpu.pipeline_mode<synchronous>, transform_indices = @transform_7, window_bounds = array<i64: 32, 128>}, {pipeline_mode = #tpu.pipeline_mode<synchronous>, transform_indices = @transform_8, window_bounds = array<i64: 1, 128>}, {transform_indices = @transform_9, window_bounds = array<i64: 8, 128>}]} {
    %c0 = arith.constant 0 : index
    %c0_0 = arith.constant 0 : index
    %0 = vector.load %arg1[%c0, %c0_0] : memref<8x3xf32, #tpu.memory_space<vmem>>, vector<8x3xf32>
    %c0_1 = arith.constant 0 : index
    %c0_2 = arith.constant 0 : index
    %1 = vector.load %arg2[%c0_1, %c0_2] : memref<3x32xf32, #tpu.memory_space<vmem>>, vector<3x32xf32>
    %c0_3 = arith.constant 0 : index
    %c0_4 = arith.constant 0 : index
    %2 = vector.load %arg3[%c0_3, %c0_4] : memref<1x32xf32, #tpu.memory_space<vmem>>, vector<1x32xf32>
    %cst = arith.constant dense<0.000000e+00> : vector<8x32xf32>
    %3 = tpu.matmul %0, %1, %cst {dimension_numbers = #tpu.dot_dimension_numbers<[1], [0], [0], [1], [0, 0, 1, 1], [], []>} : vector<8x3xf32>, vector<3x32xf32>, vector<8x32xf32> -> vector<8x32xf32>
    %4 = vector.broadcast %2 : vector<1x32xf32> to vector<8x32xf32>
    %5 = arith.addf %3, %4 : vector<8x32xf32>
    %cst_5 = arith.constant 0.000000e+00 : f32
    %6 = vector.broadcast %cst_5 : f32 to vector<8x32xf32>
    %7 = arith.maximumf %5, %6 : vector<8x32xf32>
    %c0_6 = arith.constant 0 : index
    %c0_7 = arith.constant 0 : index
    %8 = vector.load %arg4[%c0_6, %c0_7] : memref<32x32xf32, #tpu.memory_space<vmem>>, vector<32x32xf32>
    %c0_8 = arith.constant 0 : index
    %c0_9 = arith.constant 0 : index
    %9 = vector.load %arg5[%c0_8, %c0_9] : memref<1x32xf32, #tpu.memory_space<vmem>>, vector<1x32xf32>
    %cst_10 = arith.constant dense<0.000000e+00> : vector<8x32xf32>
    %10 = tpu.matmul %7, %8, %cst_10 {dimension_numbers = #tpu.dot_dimension_numbers<[1], [0], [0], [1], [0, 0, 1, 1], [], []>} : vector<8x32xf32>, vector<32x32xf32>, vector<8x32xf32> -> vector<8x32xf32>
    %11 = vector.broadcast %9 : vector<1x32xf32> to vector<8x32xf32>
    %12 = arith.addf %10, %11 : vector<8x32xf32>
    %cst_11 = arith.constant 0.000000e+00 : f32
    %13 = vector.broadcast %cst_11 : f32 to vector<8x32xf32>
    %14 = arith.maximumf %12, %13 : vector<8x32xf32>
    %c0_12 = arith.constant 0 : index
    %c0_13 = arith.constant 0 : index
    %15 = vector.load %arg6[%c0_12, %c0_13] : memref<32x32xf32, #tpu.memory_space<vmem>>, vector<32x32xf32>
    %c0_14 = arith.constant 0 : index
    %c0_15 = arith.constant 0 : index
    %16 = vector.load %arg7[%c0_14, %c0_15] : memref<1x32xf32, #tpu.memory_space<vmem>>, vector<1x32xf32>
    %cst_16 = arith.constant dense<0.000000e+00> : vector<8x32xf32>
    %17 = tpu.matmul %14, %15, %cst_16 {dimension_numbers = #tpu.dot_dimension_numbers<[1], [0], [0], [1], [0, 0, 1, 1], [], []>} : vector<8x32xf32>, vector<32x32xf32>, vector<8x32xf32> -> vector<8x32xf32>
    %18 = vector.broadcast %16 : vector<1x32xf32> to vector<8x32xf32>
    %19 = arith.addf %17, %18 : vector<8x32xf32>
    %cst_17 = arith.constant 0.000000e+00 : f32
    %20 = vector.broadcast %cst_17 : f32 to vector<8x32xf32>
    %21 = arith.maximumf %19, %20 : vector<8x32xf32>
    %c0_18 = arith.constant 0 : index
    %c0_19 = arith.constant 0 : index
    %22 = vector.load %arg8[%c0_18, %c0_19] : memref<32x128xf32, #tpu.memory_space<vmem>>, vector<32x128xf32>
    %c0_20 = arith.constant 0 : index
    %c0_21 = arith.constant 0 : index
    %23 = vector.load %arg9[%c0_20, %c0_21] : memref<1x128xf32, #tpu.memory_space<vmem>>, vector<1x128xf32>
    %cst_22 = arith.constant dense<0.000000e+00> : vector<8x128xf32>
    %24 = tpu.matmul %21, %22, %cst_22 {dimension_numbers = #tpu.dot_dimension_numbers<[1], [0], [0], [1], [0, 0, 1, 1], [], []>} : vector<8x32xf32>, vector<32x128xf32>, vector<8x128xf32> -> vector<8x128xf32>
    %25 = vector.broadcast %23 : vector<1x128xf32> to vector<8x128xf32>
    %26 = arith.addf %24, %25 : vector<8x128xf32>
    %27 = math.tanh %26 : vector<8x128xf32>
    %c0_23 = arith.constant 0 : index
    %c0_24 = arith.constant 0 : index
    %28 = vector.load %arg10[%c0_23, %c0_24] : memref<8x128xf32, #tpu.memory_space<vmem>>, vector<8x128xf32>
    tpu.vector_store %arg10[%c0_23, %c0_24], %27 {strides = array<i32>} : memref<8x128xf32, #tpu.memory_space<vmem>>, vector<8x128xf32>,
    return
  }
  func.func @transform_0(%arg0: i32) -> (i32, i32) {
    %c0_i32 = arith.constant 0 : i32
    %c0_i32_0 = arith.constant 0 : i32
    return %arg0, %c0_i32 : i32, i32
  }
  func.func @transform_1(%arg0: i32) -> (i32, i32) {
    %c0_i32 = arith.constant 0 : i32
    %c0_i32_0 = arith.constant 0 : i32
    %c0_i32_1 = arith.constant 0 : i32
    return %c0_i32, %c0_i32_0 : i32, i32
  }
  func.func @transform_2(%arg0: i32) -> (i32, i32) {
    %c0_i32 = arith.constant 0 : i32
    %c0_i32_0 = arith.constant 0 : i32
    %c0_i32_1 = arith.constant 0 : i32
    return %c0_i32, %c0_i32_0 : i32, i32
  }
  func.func @transform_3(%arg0: i32) -> (i32, i32) {
    %c0_i32 = arith.constant 0 : i32
    %c0_i32_0 = arith.constant 0 : i32
    %c0_i32_1 = arith.constant 0 : i32
    return %c0_i32, %c0_i32_0 : i32, i32
  }
  func.func @transform_4(%arg0: i32) -> (i32, i32) {
    %c0_i32 = arith.constant 0 : i32
    %c0_i32_0 = arith.constant 0 : i32
    %c0_i32_1 = arith.constant 0 : i32
    return %c0_i32, %c0_i32_0 : i32, i32
  }
  func.func @transform_5(%arg0: i32) -> (i32, i32) {
    %c0_i32 = arith.constant 0 : i32
    %c0_i32_0 = arith.constant 0 : i32
    %c0_i32_1 = arith.constant 0 : i32
    return %c0_i32, %c0_i32_0 : i32, i32
  }
  func.func @transform_6(%arg0: i32) -> (i32, i32) {
    %c0_i32 = arith.constant 0 : i32
    %c0_i32_0 = arith.constant 0 : i32
    %c0_i32_1 = arith.constant 0 : i32
    return %c0_i32, %c0_i32_0 : i32, i32
  }
  func.func @transform_7(%arg0: i32) -> (i32, i32) {
    %c0_i32 = arith.constant 0 : i32
    %c0_i32_0 = arith.constant 0 : i32
    %c0_i32_1 = arith.constant 0 : i32
    return %c0_i32, %c0_i32_0 : i32, i32
  }
  func.func @transform_8(%arg0: i32) -> (i32, i32) {
    %c0_i32 = arith.constant 0 : i32
    %c0_i32_0 = arith.constant 0 : i32
    %c0_i32_1 = arith.constant 0 : i32
    return %c0_i32, %c0_i32_0 : i32, i32
  }
  func.func @transform_9(%arg0: i32) -> (i32, i32) {
    %c0_i32 = arith.constant 0 : i32
    %c0_i32_0 = arith.constant 0 : i32
    return %arg0, %c0_i32 : i32, i32
  }
}

</mosaic_0001>

<llo_original>
// kernel: tpu_custom_call.1
$region0: #{tpu_custom_call.1}
  #allocation0 [shape = 'u32[]', space=smem, size = 0x4, offset = 0x4, fixed_abs, tag = 'smem constant byte address 0x4 - core index']
  #allocation1 [shape = 'u32[144,128]{1,0:T(1,128)}', space=vmem, size = 0x12000, scoped, tag = 'internal scratch']
  %s0 = inlined_call_operand.vmem [shape: f32[16,3], index: 0, kind: input, shape index: {}]
  %s1 = inlined_call_operand.hbm [shape: f32[3,32], index: 1, kind: input, shape index: {}]
  %s2 = inlined_call_operand.hbm [shape: f32[1,32], index: 2, kind: input, shape index: {}]
  %s3 = inlined_call_operand.hbm [shape: f32[32,32], index: 3, kind: input, shape index: {}]
  %s4 = inlined_call_operand.hbm [shape: f32[1,32], index: 4, kind: input, shape index: {}]
  %s5 = inlined_call_operand.hbm [shape: f32[32,32], index: 5, kind: input, shape index: {}]
  %s6 = inlined_call_operand.hbm [shape: f32[1,32], index: 6, kind: input, shape index: {}]
  %s7 = inlined_call_operand.vmem [shape: f32[32,128], index: 7, kind: input, shape index: {}]
  %s8 = inlined_call_operand.vmem [shape: f32[1,128], index: 8, kind: input, shape index: {}]
  %s9 = inlined_call_operand.hbm [shape: f32[16,128], index: 9, kind: output, shape index: {}]
  %s10 = sld [smem:[#allocation0]]
  $region93: #{tpu_custom_call.1} parent=0
    _
  %s12 = ssub.s32 1, %s10
  %s13 = scalar_select 0, %s12, %s10
  $region1: #{tpu_custom_call.1} parent=0
    #allocation2 [shape = 'u8[2048]{0}', space=vmem, size = 0x800, scoped, tag = 'input window, operand 1, single buffered']
    #allocation3 [shape = 's32[2]{0}', space=sflag, size = 0x8, scoped, tag = 'scoped memory for tpu_custom_call.1']
    #allocation4 [shape = 's32[2]{0}', space=sflag, size = 0x8, scoped, tag = 'scoped memory for tpu_custom_call.1']
    #allocation5 [shape = 'u8[512]{0}', space=vmem, size = 0x400, scoped, tag = 'input window, operand 2, single buffered']
    #allocation6 [shape = 's32[1]{0}', space=sflag, size = 0x4, scoped, tag = 'scoped memory for tpu_custom_call.1']
    #allocation7 [shape = 'u8[16384]{0}', space=vmem, size = 0x4000, scoped, tag = 'input window, operand 3, single buffered']
    #allocation8 [shape = 'u8[512]{0}', space=vmem, size = 0x400, scoped, tag = 'input window, operand 4, single buffered']
    #allocation9 [shape = 's32[1]{0}', space=sflag, size = 0x4, scoped, tag = 'scoped memory for tpu_custom_call.1']
    #allocation10 [shape = 'u8[16384]{0}', space=vmem, size = 0x4000, scoped, tag = 'input window, operand 5, single buffered']
    #allocation11 [shape = 'u8[512]{0}', space=vmem, size = 0x400, scoped, tag = 'input window, operand 6, single buffered']
    #allocation12 [shape = 's32[1]{0}', space=sflag, size = 0x4, scoped, tag = 'scoped memory for tpu_custom_call.1']
    #allocation13 [shape = 'u8[8192]{0}', space=vmem, size = 0x2000, scoped, tag = 'output window, operand 0']
    %14 = vsyncpa [#allocation3], 0
    %15 = vsyncpa [#allocation6], 0
    %16 = vsyncpa [#allocation9], 0
    %17 = vsyncpa [#allocation12], 0
    %18 = vsyncpa [#allocation4], 0
    %s19 = scalar_lea.sflag [#allocation4], 1
    %20 = vsyncpa %s19, 0
    loop: start=0, step=1, limit=4
    $region2: #{tpu_custom_call.1} parent=1 // loop_pre_header
      _
    $region3: #{tpu_custom_call.1} parent=1 // loop_header
      %s22 = sphi 0, %s26
      %p23 = scmp.ge.s32.totalorder %s22, 4
      %s32 = sphi 0, %s34
      %s35 = sphi 0, %s32
      %s36 = sphi 0, %s35
      %s52 = sphi 0, %s36
      %s56 = sphi 0, %s56
      %s58 = sphi 0, %s56
      %s59 = sphi 0, %s58
      %s73 = sphi 0, %s59
      %s77 = sphi 0, %s77
      %s79 = sphi 0, %s77
      %s80 = sphi 0, %s79
      %s94 = sphi 0, %s80
      %s98 = sphi 0, %s98
      %s100 = sphi 0, %s98
      %s101 = sphi 0, %s100
      %s115 = sphi 0, %s101
      %s119 = sphi 0, %s119
      %s121 = sphi 0, %s119
      %s122 = sphi 0, %s121
      %s136 = sphi 0, %s122
      %s140 = sphi 0, %s140
      %s142 = sphi 0, %s140
      %s143 = sphi 0, %s142
      %s157 = sphi 0, %s143
      %s161 = sphi 0, %s161
      %s163 = sphi 0, %s161
      %s164 = sphi 0, %s163
      %s178 = sphi 0, %s164
      %s182 = sphi 0, %s182
      %s184 = sphi 0, %s182
      %s185 = sphi 0, %s184
      %s199 = sphi 0, %s185
      %s203 = sphi 0, %s203
      %s205 = sphi 0, %s203
      %s206 = sphi 0, %s205
      %s220 = sphi 0, %s206
      %s226 = sphi 0, %s228
      %s229 = sphi 0, %s226
      %s230 = sphi 0, %s229
      %s246 = sphi 0, %s230
    $region4: #{tpu_custom_call.1} parent=1 // loop_header_branch
      %25 = sbr.rel (%p23) target = $region8
    $region5: #{tpu_custom_call.1} parent=1 // loop_body
      %s27 = ssub.s32 %s22, 1
      %s28 = ssub.s32 %s22, 2
      %s29 = sadd.s32 %s22, 1
      %s30 = ssub.s32 %s22, %s29
      %p31 = scmp.eq.s32.totalorder %s30, 0
      %s33 = sadd.s32 %s32, 1
      %s34 = scalar_select %p31, %s32, %s33
      %p37 = pneg %p31
      %p38 = scmp.eq.s32.totalorder %s22, 1
      %p39 = por %p37, %p38
      %p40 = scmp.ne.s32.totalorder %s32, %s35
      %p41 = scmp.eq.s32.totalorder %s22, 0
      %p42 = por %p40, %p41
      %p43 = scmp.ne.s32.totalorder %s32, %s35
      %p44 = scmp.eq.s32.totalorder %s27, 1
      %p45 = por %p43, %p44
      %p46 = scmp.ne.s32.totalorder %s35, %s36
      %p47 = scmp.eq.s32.totalorder %s27, 0
      %p48 = por %p46, %p47
      %p49 = scmp.ne.s32.totalorder %s35, %s36
      %p50 = scmp.eq.s32.totalorder %s28, 1
      %p51 = por %p49, %p50
      %p53 = scmp.ne.s32.totalorder %s36, %s52
      %p54 = scmp.eq.s32.totalorder %s28, 0
      %p55 = por %p53, %p54
      %s57 = sadd.s32 %s56, 1
      %p60 = scmp.eq.s32.totalorder %s22, 1
      %p61 = scmp.ne.s32.totalorder %s56, %s58
      %p62 = scmp.eq.s32.totalorder %s22, 0
      %p63 = por %p61, %p62
      %p64 = scmp.ne.s32.totalorder %s56, %s58
      %p65 = scmp.eq.s32.totalorder %s27, 1
      %p66 = por %p64, %p65
      %p67 = scmp.ne.s32.totalorder %s58, %s59
      %p68 = scmp.eq.s32.totalorder %s27, 0
      %p69 = por %p67, %p68
      %p70 = scmp.ne.s32.totalorder %s58, %s59
      %p71 = scmp.eq.s32.totalorder %s28, 1
      %p72 = por %p70, %p71
      %p74 = scmp.ne.s32.totalorder %s59, %s73
      %p75 = scmp.eq.s32.totalorder %s28, 0
      %p76 = por %p74, %p75
      %s78 = sadd.s32 %s77, 1
      %p81 = scmp.eq.s32.totalorder %s22, 1
      %p82 = scmp.ne.s32.totalorder %s77, %s79
      %p83 = scmp.eq.s32.totalorder %s22, 0
      %p84 = por %p82, %p83
      %p85 = scmp.ne.s32.totalorder %s77, %s79
      %p86 = scmp.eq.s32.totalorder %s27, 1
      %p87 = por %p85, %p86
      %p88 = scmp.ne.s32.totalorder %s79, %s80
      %p89 = scmp.eq.s32.totalorder %s27, 0
      %p90 = por %p88, %p89
      %p91 = scmp.ne.s32.totalorder %s79, %s80
      %p92 = scmp.eq.s32.totalorder %s28, 1
      %p93 = por %p91, %p92
      %p95 = scmp.ne.s32.totalorder %s80, %s94
      %p96 = scmp.eq.s32.totalorder %s28, 0
      %p97 = por %p95, %p96
      %s99 = sadd.s32 %s98, 1
      %p102 = scmp.eq.s32.totalorder %s22, 1
      %p103 = scmp.ne.s32.totalorder %s98, %s100
      %p104 = scmp.eq.s32.totalorder %s22, 0
      %p105 = por %p103, %p104
      %p106 = scmp.ne.s32.totalorder %s98, %s100
      %p107 = scmp.eq.s32.totalorder %s27, 1
      %p108 = por %p106, %p107
      %p109 = scmp.ne.s32.totalorder %s100, %s101
      %p110 = scmp.eq.s32.totalorder %s27, 0
      %p111 = por %p109, %p110
      %p112 = scmp.ne.s32.totalorder %s100, %s101
      %p113 = scmp.eq.s32.totalorder %s28, 1
      %p114 = por %p112, %p113
      %p116 = scmp.ne.s32.totalorder %s101, %s115
      %p117 = scmp.eq.s32.totalorder %s28, 0
      %p118 = por %p116, %p117
      %s120 = sadd.s32 %s119, 1
      %p123 = scmp.eq.s32.totalorder %s22, 1
      %p124 = scmp.ne.s32.totalorder %s119, %s121
      %p125 = scmp.eq.s32.totalorder %s22, 0
      %p126 = por %p124, %p125
      %p127 = scmp.ne.s32.totalorder %s119, %s121
      %p128 = scmp.eq.s32.totalorder %s27, 1
      %p129 = por %p127, %p128
      %p130 = scmp.ne.s32.totalorder %s121, %s122
      %p131 = scmp.eq.s32.totalorder %s27, 0
      %p132 = por %p130, %p131
      %p133 = scmp.ne.s32.totalorder %s121, %s122
      %p134 = scmp.eq.s32.totalorder %s28, 1
      %p135 = por %p133, %p134
      %p137 = scmp.ne.s32.totalorder %s122, %s136
      %p138 = scmp.eq.s32.totalorder %s28, 0
      %p139 = por %p137, %p138
      %s141 = sadd.s32 %s140, 1
      %p144 = scmp.eq.s32.totalorder %s22, 1
      %p145 = scmp.ne.s32.totalorder %s140, %s142
      %p146 = scmp.eq.s32.totalorder %s22, 0
      %p147 = por %p145, %p146
      %p148 = scmp.ne.s32.totalorder %s140, %s142
      %p149 = scmp.eq.s32.totalorder %s27, 1
      %p150 = por %p148, %p149
      %p151 = scmp.ne.s32.totalorder %s142, %s143
      %p152 = scmp.eq.s32.totalorder %s27, 0
      %p153 = por %p151, %p152
      %p154 = scmp.ne.s32.totalorder %s142, %s143
      %p155 = scmp.eq.s32.totalorder %s28, 1
      %p156 = por %p154, %p155
      %p158 = scmp.ne.s32.totalorder %s143, %s157
      %p159 = scmp.eq.s32.totalorder %s28, 0
      %p160 = por %p158, %p159
      %s162 = sadd.s32 %s161, 1
      %p165 = scmp.eq.s32.totalorder %s22, 1
      %p166 = scmp.ne.s32.totalorder %s161, %s163
      %p167 = scmp.eq.s32.totalorder %s22, 0
      %p168 = por %p166, %p167
      %p169 = scmp.ne.s32.totalorder %s161, %s163
      %p170 = scmp.eq.s32.totalorder %s27, 1
      %p171 = por %p169, %p170
      %p172 = scmp.ne.s32.totalorder %s163, %s164
      %p173 = scmp.eq.s32.totalorder %s27, 0
      %p174 = por %p172, %p173
      %p175 = scmp.ne.s32.totalorder %s163, %s164
      %p176 = scmp.eq.s32.totalorder %s28, 1
      %p177 = por %p175, %p176
      %p179 = scmp.ne.s32.totalorder %s164, %s178
      %p180 = scmp.eq.s32.totalorder %s28, 0
      %p181 = por %p179, %p180
      %s183 = sadd.s32 %s182, 1
      %p186 = scmp.eq.s32.totalorder %s22, 1
      %p187 = scmp.ne.s32.totalorder %s182, %s184
      %p188 = scmp.eq.s32.totalorder %s22, 0
      %p189 = por %p187, %p188
      %p190 = scmp.ne.s32.totalorder %s182, %s184
      %p191 = scmp.eq.s32.totalorder %s27, 1
      %p192 = por %p190, %p191
      %p193 = scmp.ne.s32.totalorder %s184, %s185
      %p194 = scmp.eq.s32.totalorder %s27, 0
      %p195 = por %p193, %p194
      %p196 = scmp.ne.s32.totalorder %s184, %s185
      %p197 = scmp.eq.s32.totalorder %s28, 1
      %p198 = por %p196, %p197
      %p200 = scmp.ne.s32.totalorder %s185, %s199
      %p201 = scmp.eq.s32.totalorder %s28, 0
      %p202 = por %p200, %p201
      %s204 = sadd.s32 %s203, 1
      %p207 = scmp.eq.s32.totalorder %s22, 1
      %p208 = scmp.ne.s32.totalorder %s203, %s205
      %p209 = scmp.eq.s32.totalorder %s22, 0
      %p210 = por %p208, %p209
      %p211 = scmp.ne.s32.totalorder %s203, %s205
      %p212 = scmp.eq.s32.totalorder %s27, 1
      %p213 = por %p211, %p212
      %p214 = scmp.ne.s32.totalorder %s205, %s206
      %p215 = scmp.eq.s32.totalorder %s27, 0
      %p216 = por %p214, %p215
      %p217 = scmp.ne.s32.totalorder %s205, %s206
      %p218 = scmp.eq.s32.totalorder %s28, 1
      %p219 = por %p217, %p218
      %p221 = scmp.ne.s32.totalorder %s206, %s220
      %p222 = scmp.eq.s32.totalorder %s28, 0
      %p223 = por %p221, %p222
      %s224 = ssub.s32 %s22, %s29
      %p225 = scmp.eq.s32.totalorder %s224, 0
      %s227 = sadd.s32 %s226, 1
      %s228 = scalar_select %p225, %s226, %s227
      %p231 = pneg %p225
      %p232 = scmp.eq.s32.totalorder %s22, 1
      %p233 = por %p231, %p232
      %p234 = scmp.ne.s32.totalorder %s226, %s229
      %p235 = scmp.eq.s32.totalorder %s22, 0
      %p236 = por %p234, %p235
      %p237 = scmp.ne.s32.totalorder %s226, %s229
      %p238 = scmp.eq.s32.totalorder %s27, 1
      %p239 = por %p237, %p238
      %p240 = scmp.ne.s32.totalorder %s229, %s230
      %p241 = scmp.eq.s32.totalorder %s27, 0
      %p242 = por %p240, %p241
      %p243 = scmp.ne.s32.totalorder %s229, %s230
      %p244 = scmp.eq.s32.totalorder %s28, 1
      %p245 = por %p243, %p244
      %p247 = scmp.ne.s32.totalorder %s230, %s246
      %p248 = scmp.eq.s32.totalorder %s28, 0
      %p249 = por %p247, %p248
      %p250 = scmp.le.s32.totalorder 1, %s22
      %p251 = scmp.lt.s32.totalorder %s22, 3
      %p252 = pnand %p250, %p251
      %p253 = pneg %p252
      // Predicated region
      $region9: #{tpu_custom_call.1} parent=5 // pred_check
        _
      $region10: #{tpu_custom_call.1} parent=5 // pred_check_branch
        %255 = sbr.rel (%p252) target = $region12
      $region11: #{tpu_custom_call.1} parent=5 // pred_region
        %s256 = ssub.s32 %s22, 1
        // Predicated region
        $region13: #{tpu_custom_call.1} parent=11 // pred_check
          %p257 = pneg %p69
        $region14: #{tpu_custom_call.1} parent=11 // pred_check_branch
          %259 = sbr.rel (%p257) target = $region16
        $region15: #{tpu_custom_call.1} parent=11 // pred_region
          %s261 = ssub.s32 64, 64
          %262 = vsyncadd [#allocation3], %s261
          %s264 = sshll.u32 [#allocation2], 4
          %s265 = int_to_ptr.vmem [resolvable:$true] %s264
          %267 = dma.hbm_to_vmem [thread:$0]  %s1, 64, %s265, [#allocation3]
        $region16: #{tpu_custom_call.1} parent=11 // pred_fallthru
          _
        // Predicated region
        $region17: #{tpu_custom_call.1} parent=11 // pred_check
          %p268 = pneg %p90
        $region18: #{tpu_custom_call.1} parent=11 // pred_check_branch
          %270 = sbr.rel (%p268) target = $region20
        $region19: #{tpu_custom_call.1} parent=11 // pred_region
          %s272 = ssub.s32 16, 16
          %273 = vsyncadd [#allocation6], %s272
          %s275 = sshll.u32 [#allocation5], 4
          %s276 = int_to_ptr.vmem [resolvable:$true] %s275
          %278 = dma.hbm_to_vmem [thread:$0]  %s2, 16, %s276, [#allocation6]
        $region20: #{tpu_custom_call.1} parent=11 // pred_fallthru
          _
        // Predicated region
        $region21: #{tpu_custom_call.1} parent=11 // pred_check
          %p279 = pneg %p111
        $region22: #{tpu_custom_call.1} parent=11 // pred_check_branch
          %281 = sbr.rel (%p279) target = $region24
        $region23: #{tpu_custom_call.1} parent=11 // pred_region
          %s283 = ssub.s32 512, 512
          %284 = vsyncadd [#allocation6], %s283
          %s285 = sshll.u32 [#allocation7], 4
          %s286 = int_to_ptr.vmem [resolvable:$true] %s285
          %291 = dma.hbm_to_vmem [thread:$0]  %s3, 512, %s286, [#allocation6], 128, 128, 8
        $region24: #{tpu_custom_call.1} parent=11 // pred_fallthru
          _
        // Predicated region
        $region25: #{tpu_custom_call.1} parent=11 // pred_check
          %p292 = pneg %p132
        $region26: #{tpu_custom_call.1} parent=11 // pred_check_branch
          %294 = sbr.rel (%p292) target = $region28
        $region27: #{tpu_custom_call.1} parent=11 // pred_region
          %s296 = ssub.s32 16, 16
          %297 = vsyncadd [#allocation9], %s296
          %s299 = sshll.u32 [#allocation8], 4
          %s300 = int_to_ptr.vmem [resolvable:$true] %s299
          %302 = dma.hbm_to_vmem [thread:$0]  %s4, 16, %s300, [#allocation9]
        $region28: #{tpu_custom_call.1} parent=11 // pred_fallthru
          _
        // Predicated region
        $region29: #{tpu_custom_call.1} parent=11 // pred_check
          %p303 = pneg %p153
        $region30: #{tpu_custom_call.1} parent=11 // pred_check_branch
          %305 = sbr.rel (%p303) target = $region32
        $region31: #{tpu_custom_call.1} parent=11 // pred_region
          %s307 = ssub.s32 512, 512
          %308 = vsyncadd [#allocation9], %s307
          %s309 = sshll.u32 [#allocation10], 4
          %s310 = int_to_ptr.vmem [resolvable:$true] %s309
          %315 = dma.hbm_to_vmem [thread:$0]  %s5, 512, %s310, [#allocation9], 128, 128, 8
        $region32: #{tpu_custom_call.1} parent=11 // pred_fallthru
          _
        // Predicated region
        $region33: #{tpu_custom_call.1} parent=11 // pred_check
          %p316 = pneg %p174
        $region34: #{tpu_custom_call.1} parent=11 // pred_check_branch
          %318 = sbr.rel (%p316) target = $region36
        $region35: #{tpu_custom_call.1} parent=11 // pred_region
          %s320 = ssub.s32 16, 16
          %321 = vsyncadd [#allocation12], %s320
          %s323 = sshll.u32 [#allocation11], 4
          %s324 = int_to_ptr.vmem [resolvable:$true] %s323
          %326 = dma.hbm_to_vmem [thread:$0]  %s6, 16, %s324, [#allocation12]
        $region36: #{tpu_custom_call.1} parent=11 // pred_fallthru
          _
        // Predicated region
        $region37: #{tpu_custom_call.1} parent=11 // pred_check
          %p327 = pneg %p195
        $region38: #{tpu_custom_call.1} parent=11 // pred_check_branch
          %329 = sbr.rel (%p327) target = $region40
        $region39: #{tpu_custom_call.1} parent=11 // pred_region
          _
        $region40: #{tpu_custom_call.1} parent=11 // pred_fallthru
          _
        // Predicated region
        $region41: #{tpu_custom_call.1} parent=11 // pred_check
          %p330 = pneg %p216
        $region42: #{tpu_custom_call.1} parent=11 // pred_check_branch
          %332 = sbr.rel (%p330) target = $region44
        $region43: #{tpu_custom_call.1} parent=11 // pred_region
          _
        $region44: #{tpu_custom_call.1} parent=11 // pred_fallthru
          _
      $region12: #{tpu_custom_call.1} parent=5 // pred_fallthru
        _
      %p333 = scmp.lt.s32.totalorder %s22, 2
      // Predicated region
      $region45: #{tpu_custom_call.1} parent=5 // pred_check
        %p334 = pneg %p333
      $region46: #{tpu_custom_call.1} parent=5 // pred_check_branch
        %336 = sbr.rel (%p334) target = $region48
      $region47: #{tpu_custom_call.1} parent=5 // pred_region
        // Predicated region
        $region49: #{tpu_custom_call.1} parent=47 // pred_check
          %p337 = pneg %p42
        $region50: #{tpu_custom_call.1} parent=47 // pred_check_branch
          %339 = sbr.rel (%p337) target = $region52
        $region51: #{tpu_custom_call.1} parent=47 // pred_region
          %p340 = scmp.lt.s32.totalorder %s22, 1
          %s341 = scalar_select %p340, %s22, 1
          %s342 = smul.addr %s341, 8
          %s343 = scalar_lea.vmem %s0, %s342
        $region52: #{tpu_custom_call.1} parent=47 // pred_fallthru
          _
      $region48: #{tpu_custom_call.1} parent=5 // pred_fallthru
        _
      %p344 = scmp.le.s32.totalorder 1, %s22
      %p345 = scmp.lt.s32.totalorder %s22, 3
      %p346 = pnand %p344, %p345
      %p347 = pneg %p346
      // Predicated region
      $region53: #{tpu_custom_call.1} parent=5 // pred_check
        _
      $region54: #{tpu_custom_call.1} parent=5 // pred_check_branch
        %349 = sbr.rel (%p346) target = $region56
      $region55: #{tpu_custom_call.1} parent=5 // pred_region
        %s350 = ssub.s32 %s22, 1
        // Predicated region
        $region57: #{tpu_custom_call.1} parent=55 // pred_check
          %p351 = pneg %p69
        $region58: #{tpu_custom_call.1} parent=55 // pred_check_branch
          %353 = sbr.rel (%p351) target = $region60
        $region59: #{tpu_custom_call.1} parent=55 // pred_region
          %354 = dma.done [#allocation3], 64
        $region60: #{tpu_custom_call.1} parent=55 // pred_fallthru
          _
        // Predicated region
        $region61: #{tpu_custom_call.1} parent=55 // pred_check
          %p355 = pneg %p90
        $region62: #{tpu_custom_call.1} parent=55 // pred_check_branch
          %357 = sbr.rel (%p355) target = $region64
        $region63: #{tpu_custom_call.1} parent=55 // pred_region
          %358 = dma.done [#allocation6], 16
        $region64: #{tpu_custom_call.1} parent=55 // pred_fallthru
          _
        // Predicated region
        $region65: #{tpu_custom_call.1} parent=55 // pred_check
          %p359 = pneg %p111
        $region66: #{tpu_custom_call.1} parent=55 // pred_check_branch
          %361 = sbr.rel (%p359) target = $region68
        $region67: #{tpu_custom_call.1} parent=55 // pred_region
          %362 = dma.done [#allocation6], 512
        $region68: #{tpu_custom_call.1} parent=55 // pred_fallthru
          _
        // Predicated region
        $region69: #{tpu_custom_call.1} parent=55 // pred_check
          %p363 = pneg %p132
        $region70: #{tpu_custom_call.1} parent=55 // pred_check_branch
          %365 = sbr.rel (%p363) target = $region72
        $region71: #{tpu_custom_call.1} parent=55 // pred_region
          %366 = dma.done [#allocation9], 16
        $region72: #{tpu_custom_call.1} parent=55 // pred_fallthru
          _
        // Predicated region
        $region73: #{tpu_custom_call.1} parent=55 // pred_check
          %p367 = pneg %p153
        $region74: #{tpu_custom_call.1} parent=55 // pred_check_branch
          %369 = sbr.rel (%p367) target = $region76
        $region75: #{tpu_custom_call.1} parent=55 // pred_region
          %370 = dma.done [#allocation9], 512
        $region76: #{tpu_custom_call.1} parent=55 // pred_fallthru
          _
        // Predicated region
        $region77: #{tpu_custom_call.1} parent=55 // pred_check
          %p371 = pneg %p174
        $region78: #{tpu_custom_call.1} parent=55 // pred_check_branch
          %373 = sbr.rel (%p371) target = $region80
        $region79: #{tpu_custom_call.1} parent=55 // pred_region
          %374 = dma.done [#allocation12], 16
        $region80: #{tpu_custom_call.1} parent=55 // pred_fallthru
          _
        %p375 = scmp.lt.s32.totalorder %s27, 1
        %s376 = scalar_select %p375, %s27, 1
        %s377 = smul.addr %s376, 8
        %s378 = scalar_lea.vmem %s0, %s377
        %p379 = pneg %p48
        %p380 = pneg %p45
        %p381 = pneg %p69
        %p382 = pneg %p66
        %p383 = pneg %p90
        %p384 = pneg %p87
        %p385 = pneg %p111
        %p386 = pneg %p108
        %p387 = pneg %p132
        %p388 = pneg %p129
        %p389 = pneg %p153
        %p390 = pneg %p150
        %p391 = pneg %p174
        %p392 = pneg %p171
        %p393 = pneg %p195
        %p394 = pneg %p192
        %p395 = pneg %p216
        %p396 = pneg %p213
        %p397 = pneg %p242
        %p398 = pneg %p239
        %s399 = sand.u32 %s229, 1
        %s400 = scalar_lea.sflag [#allocation4], %s399
        %s401 = sand.u32 %s229, 1
        %s402 = smul.addr %s401, 8
        %s403 = scalar_lea.vmem [#allocation13], %s402
        %p404 = scmp.lt.s32.totalorder %s27, 1
        %s405 = scalar_select %p404, %s27, 1
        %s406 = smul.addr %s405, 8
        %s407 = scalar_lea.vmem %s0, %s406
        %v408 = vld [vmem:[%s407] sm:$0xff]
        %v409 = vld [vmem:[#allocation2] sm:$0x7]
        %v410 = vld [vmem:[#allocation5] sm:$0x1]
        %v412 = vlaneseq
        %v413 = vshrl.u32 %v412, 7
        %v414 = vsub.s32 0, %v413
        %v415 = vrot.slane %v410, %v414
        %vm417 = vcmask 23552
        %v419 = vsel %vm417, %v408, 0
        %vm421 = vcmask 1042432
        %v423 = vsel %vm421, %v409, 0
        %425 = vmatprep.subr.mxu0 0.0
        %426 = vmatpush1.msra.mxu0 0.0
        %427 = vmatprep.subr.mxu0 0.0
        %428 = vmatpush1.msra.mxu0 0.0
        %429 = vmatprep.subr.mxu0 0.0
        %430 = vmatpush1.msra.mxu0 0.0
        %431 = vmatprep.subr.mxu0 0.0
        %432 = vmatpush1.msra.mxu0 0.0
        %433 = vmatprep.subr.mxu0 0.0
        %434 = vmatpush1.msra.mxu0 0.0
        %435 = vmatprep.subr.mxu0 0.0
        %436 = vmatpush1.msra.mxu0 0.0
        %437 = vmatprep.subr.mxu0 0.0
        %438 = vmatpush1.msra.mxu0 0.0
        %439 = vmatprep.subr.mxu0 0.0
        %440 = vmatpush1.msra.mxu0 0.0
        %441 = vmatprep.subr.mxu0 0.0
        %442 = vmatpush1.msra.mxu0 0.0
        %443 = vmatprep.subr.mxu0 0.0
        %444 = vmatpush1.msra.mxu0 0.0
        %445 = vmatprep.subr.mxu0 0.0
        %446 = vmatpush1.msra.mxu0 0.0
        %447 = vmatprep.subr.mxu0 0.0
        %448 = vmatpush1.msra.mxu0 0.0
        %449 = vmatprep.subr.mxu0 0.0
        %450 = vmatpush1.msra.mxu0 0.0
        %451 = vmatprep.subr.mxu0 0.0
        %452 = vmatpush1.msra.mxu0 0.0
        %453 = vmatprep.subr.mxu0 0.0
        %454 = vmatpush1.msra.mxu0 0.0
        %455 = vmatprep.subr.mxu0 0.0
        %456 = vmatpush1.msra.mxu0 %v423
        %457 = vmatprep.subr.mxu0 0.0
        %458 = vmatpush2.msra.mxu0 0.0
        %459 = vmatprep.subr.mxu0 0.0
        %460 = vmatpush2.msra.mxu0 0.0
        %461 = vmatprep.subr.mxu0 0.0
        %462 = vmatpush2.msra.mxu0 0.0
        %463 = vmatprep.subr.mxu0 0.0
        %464 = vmatpush2.msra.mxu0 0.0
        %465 = vmatprep.subr.mxu0 0.0
        %466 = vmatpush2.msra.mxu0 0.0
        %467 = vmatprep.subr.mxu0 0.0
        %468 = vmatpush2.msra.mxu0 0.0
        %469 = vmatprep.subr.mxu0 0.0
        %470 = vmatpush2.msra.mxu0 0.0
        %471 = vmatprep.subr.mxu0 0.0
        %472 = vmatpush2.msra.mxu0 0.0
        %473 = vmatprep.subr.mxu0 0.0
        %474 = vmatpush2.msra.mxu0 0.0
        %475 = vmatprep.subr.mxu0 0.0
        %476 = vmatpush2.msra.mxu0 0.0
        %477 = vmatprep.subr.mxu0 0.0
        %478 = vmatpush2.msra.mxu0 0.0
        %479 = vmatprep.subr.mxu0 0.0
        %480 = vmatpush2.msra.mxu0 0.0
        %481 = vmatprep.subr.mxu0 0.0
        %482 = vmatpush2.msra.mxu0 0.0
        %483 = vmatprep.subr.mxu0 0.0
        %484 = vmatpush2.msra.mxu0 0.0
        %485 = vmatprep.subr.mxu0 0.0
        %486 = vmatpush2.msra.mxu0 0.0
        %487 = vmatprep.subr.mxu0 0.0
        %488 = vmatpush2.msra.mxu0 0.0
        %489 = vmatprep.mubr.f32.mxu0 0.0
        %490 = vmatmul.mubr.f32.gmra.mxu0 %v419
        %v491 = vpop.f32.mrf.mxu0
        %v492 = vadd.f32 %v415, %v491
        %v493 = vpop.f32.mrf.mxu0
        %494 = vdwg.mxu0
        %v495 = vmax.f32 %v492, 0.0
        %v496 = vld [vmem:[#allocation7] sm:$0xff]
        %v497 = vld [vmem:[#allocation7 + $0x8] sm:$0xff]
        %v498 = vld [vmem:[#allocation7 + $0x10] sm:$0xff]
        %v499 = vld [vmem:[#allocation7 + $0x18] sm:$0xff]
        %v500 = vld [vmem:[#allocation8] sm:$0x1]
        %v502 = vlaneseq
        %v503 = vshrl.u32 %v502, 7
        %v504 = vsub.s32 0, %v503
        %v505 = vrot.slane %v500, %v504
        %vm507 = vcmask 261120
        %v509 = vsel %vm507, %v495, 0
        %511 = vmatprep.subr.mxu0 0.0
        %512 = vmatpush1.msra.mxu0 0.0
        %513 = vmatprep.subr.mxu0 0.0
        %514 = vmatpush1.msra.mxu0 0.0
        %515 = vmatprep.subr.mxu0 0.0
        %516 = vmatpush1.msra.mxu0 0.0
        %517 = vmatprep.subr.mxu0 0.0
        %518 = vmatpush1.msra.mxu0 0.0
        %519 = vmatprep.subr.mxu0 0.0
        %520 = vmatpush1.msra.mxu0 0.0
        %521 = vmatprep.subr.mxu0 0.0
        %522 = vmatpush1.msra.mxu0 0.0
        %523 = vmatprep.subr.mxu0 0.0
        %524 = vmatpush1.msra.mxu0 0.0
        %525 = vmatprep.subr.mxu0 0.0
        %526 = vmatpush1.msra.mxu0 0.0
        %527 = vmatprep.subr.mxu0 0.0
        %528 = vmatpush1.msra.mxu0 0.0
        %529 = vmatprep.subr.mxu0 0.0
        %530 = vmatpush1.msra.mxu0 0.0
        %531 = vmatprep.subr.mxu0 0.0
        %532 = vmatpush1.msra.mxu0 0.0
        %533 = vmatprep.subr.mxu0 0.0
        %534 = vmatpush1.msra.mxu0 0.0
        %535 = vmatprep.subr.mxu0 0.0
        %536 = vmatpush1.msra.mxu0 %v499
        %537 = vmatprep.subr.mxu0 0.0
        %538 = vmatpush1.msra.mxu0 %v498
        %539 = vmatprep.subr.mxu0 0.0
        %540 = vmatpush1.msra.mxu0 %v497
        %541 = vmatprep.subr.mxu0 0.0
        %542 = vmatpush1.msra.mxu0 %v496
        %543 = vmatprep.subr.mxu0 0.0
        %544 = vmatpush2.msra.mxu0 0.0
        %545 = vmatprep.subr.mxu0 0.0
        %546 = vmatpush2.msra.mxu0 0.0
        %547 = vmatprep.subr.mxu0 0.0
        %548 = vmatpush2.msra.mxu0 0.0
        %549 = vmatprep.subr.mxu0 0.0
        %550 = vmatpush2.msra.mxu0 0.0
        %551 = vmatprep.subr.mxu0 0.0
        %552 = vmatpush2.msra.mxu0 0.0
        %553 = vmatprep.subr.mxu0 0.0
        %554 = vmatpush2.msra.mxu0 0.0
        %555 = vmatprep.subr.mxu0 0.0
        %556 = vmatpush2.msra.mxu0 0.0
        %557 = vmatprep.subr.mxu0 0.0
        %558 = vmatpush2.msra.mxu0 0.0
        %559 = vmatprep.subr.mxu0 0.0
        %560 = vmatpush2.msra.mxu0 0.0
        %561 = vmatprep.subr.mxu0 0.0
        %562 = vmatpush2.msra.mxu0 0.0
        %563 = vmatprep.subr.mxu0 0.0
        %564 = vmatpush2.msra.mxu0 0.0
        %565 = vmatprep.subr.mxu0 0.0
        %566 = vmatpush2.msra.mxu0 0.0
        %567 = vmatprep.subr.mxu0 0.0
        %568 = vmatpush2.msra.mxu0 0.0
        %569 = vmatprep.subr.mxu0 0.0
        %570 = vmatpush2.msra.mxu0 0.0
        %571 = vmatprep.subr.mxu0 0.0
        %572 = vmatpush2.msra.mxu0 0.0
        %573 = vmatprep.subr.mxu0 0.0
        %574 = vmatpush2.msra.mxu0 0.0
        %575 = vmatprep.mubr.f32.mxu0 0.0
        %576 = vmatmul.mubr.f32.gmra.mxu0 %v509
        %v577 = vpop.f32.mrf.mxu0
        %v578 = vadd.f32 %v505, %v577
        %v579 = vpop.f32.mrf.mxu0
        %580 = vdwg.mxu0
        %v581 = vmax.f32 %v578, 0.0
        %v582 = vld [vmem:[#allocation10] sm:$0xff]
        %v583 = vld [vmem:[#allocation10 + $0x8] sm:$0xff]
        %v584 = vld [vmem:[#allocation10 + $0x10] sm:$0xff]
        %v585 = vld [vmem:[#allocation10 + $0x18] sm:$0xff]
        %v586 = vld [vmem:[#allocation11] sm:$0x1]
        %v588 = vlaneseq
        %v589 = vshrl.u32 %v588, 7
        %v590 = vsub.s32 0, %v589
        %v591 = vrot.slane %v586, %v590
        %v594 = vsel %vm507, %v581, 0
        %596 = vmatprep.subr.mxu0 0.0
        %597 = vmatpush1.msra.mxu0 0.0
        %598 = vmatprep.subr.mxu0 0.0
        %599 = vmatpush1.msra.mxu0 0.0
        %600 = vmatprep.subr.mxu0 0.0
        %601 = vmatpush1.msra.mxu0 0.0
        %602 = vmatprep.subr.mxu0 0.0
        %603 = vmatpush1.msra.mxu0 0.0
        %604 = vmatprep.subr.mxu0 0.0
        %605 = vmatpush1.msra.mxu0 0.0
        %606 = vmatprep.subr.mxu0 0.0
        %607 = vmatpush1.msra.mxu0 0.0
        %608 = vmatprep.subr.mxu0 0.0
        %609 = vmatpush1.msra.mxu0 0.0
        %610 = vmatprep.subr.mxu0 0.0
        %611 = vmatpush1.msra.mxu0 0.0
        %612 = vmatprep.subr.mxu0 0.0
        %613 = vmatpush1.msra.mxu0 0.0
        %614 = vmatprep.subr.mxu0 0.0
        %615 = vmatpush1.msra.mxu0 0.0
        %616 = vmatprep.subr.mxu0 0.0
        %617 = vmatpush1.msra.mxu0 0.0
        %618 = vmatprep.subr.mxu0 0.0
        %619 = vmatpush1.msra.mxu0 0.0
        %620 = vmatprep.subr.mxu0 0.0
        %621 = vmatpush1.msra.mxu0 %v585
        %622 = vmatprep.subr.mxu0 0.0
        %623 = vmatpush1.msra.mxu0 %v584
        %624 = vmatprep.subr.mxu0 0.0
        %625 = vmatpush1.msra.mxu0 %v583
        %626 = vmatprep.subr.mxu0 0.0
        %627 = vmatpush1.msra.mxu0 %v582
        %628 = vmatprep.subr.mxu0 0.0
        %629 = vmatpush2.msra.mxu0 0.0
        %630 = vmatprep.subr.mxu0 0.0
        %631 = vmatpush2.msra.mxu0 0.0
        %632 = vmatprep.subr.mxu0 0.0
        %633 = vmatpush2.msra.mxu0 0.0
        %634 = vmatprep.subr.mxu0 0.0
        %635 = vmatpush2.msra.mxu0 0.0
        %636 = vmatprep.subr.mxu0 0.0
        %637 = vmatpush2.msra.mxu0 0.0
        %638 = vmatprep.subr.mxu0 0.0
        %639 = vmatpush2.msra.mxu0 0.0
        %640 = vmatprep.subr.mxu0 0.0
        %641 = vmatpush2.msra.mxu0 0.0
        %642 = vmatprep.subr.mxu0 0.0
        %643 = vmatpush2.msra.mxu0 0.0
        %644 = vmatprep.subr.mxu0 0.0
        %645 = vmatpush2.msra.mxu0 0.0
        %646 = vmatprep.subr.mxu0 0.0
        %647 = vmatpush2.msra.mxu0 0.0
        %648 = vmatprep.subr.mxu0 0.0
        %649 = vmatpush2.msra.mxu0 0.0
        %650 = vmatprep.subr.mxu0 0.0
        %651 = vmatpush2.msra.mxu0 0.0
        %652 = vmatprep.subr.mxu0 0.0
        %653 = vmatpush2.msra.mxu0 0.0
        %654 = vmatprep.subr.mxu0 0.0
        %655 = vmatpush2.msra.mxu0 0.0
        %656 = vmatprep.subr.mxu0 0.0
        %657 = vmatpush2.msra.mxu0 0.0
        %658 = vmatprep.subr.mxu0 0.0
        %659 = vmatpush2.msra.mxu0 0.0
        %660 = vmatprep.mubr.f32.mxu0 0.0
        %661 = vmatmul.mubr.f32.gmra.mxu0 %v594
        %v662 = vpop.f32.mrf.mxu0
        %v663 = vadd.f32 %v591, %v662
        %v664 = vpop.f32.mrf.mxu0
        %665 = vdwg.mxu0
        %v666 = vmax.f32 %v663, 0.0
        %v667 = vld [vmem:[%s7] sm:$0xff]
        %v668 = vld [vmem:[%s7 + $0x8] sm:$0xff]
        %v669 = vld [vmem:[%s7 + $0x10] sm:$0xff]
        %v670 = vld [vmem:[%s7 + $0x18] sm:$0xff]
        %v671 = vld [vmem:[%s8] sm:$0x1]
        %v673 = vlaneseq
        %v674 = vshrl.u32 %v673, 7
        %v675 = vsub.s32 0, %v674
        %v676 = vrot.slane %v671, %v675
        %v679 = vsel %vm507, %v666, 0
        %681 = vmatprep.subr.mxu0 0.0
        %682 = vmatpush1.msra.mxu0 0.0
        %683 = vmatprep.subr.mxu0 0.0
        %684 = vmatpush1.msra.mxu0 0.0
        %685 = vmatprep.subr.mxu0 0.0
        %686 = vmatpush1.msra.mxu0 0.0
        %687 = vmatprep.subr.mxu0 0.0
        %688 = vmatpush1.msra.mxu0 0.0
        %689 = vmatprep.subr.mxu0 0.0
        %690 = vmatpush1.msra.mxu0 0.0
        %691 = vmatprep.subr.mxu0 0.0
        %692 = vmatpush1.msra.mxu0 0.0
        %693 = vmatprep.subr.mxu0 0.0
        %694 = vmatpush1.msra.mxu0 0.0
        %695 = vmatprep.subr.mxu0 0.0
        %696 = vmatpush1.msra.mxu0 0.0
        %697 = vmatprep.subr.mxu0 0.0
        %698 = vmatpush1.msra.mxu0 0.0
        %699 = vmatprep.subr.mxu0 0.0
        %700 = vmatpush1.msra.mxu0 0.0
        %701 = vmatprep.subr.mxu0 0.0
        %702 = vmatpush1.msra.mxu0 0.0
        %703 = vmatprep.subr.mxu0 0.0
        %704 = vmatpush1.msra.mxu0 0.0
        %705 = vmatprep.subr.mxu0 0.0
        %706 = vmatpush1.msra.mxu0 %v670
        %707 = vmatprep.subr.mxu0 0.0
        %708 = vmatpush1.msra.mxu0 %v669
        %709 = vmatprep.subr.mxu0 0.0
        %710 = vmatpush1.msra.mxu0 %v668
        %711 = vmatprep.subr.mxu0 0.0
        %712 = vmatpush1.msra.mxu0 %v667
        %713 = vmatprep.subr.mxu0 0.0
        %714 = vmatpush2.msra.mxu0 0.0
        %715 = vmatprep.subr.mxu0 0.0
        %716 = vmatpush2.msra.mxu0 0.0
        %717 = vmatprep.subr.mxu0 0.0
        %718 = vmatpush2.msra.mxu0 0.0
        %719 = vmatprep.subr.mxu0 0.0
        %720 = vmatpush2.msra.mxu0 0.0
        %721 = vmatprep.subr.mxu0 0.0
        %722 = vmatpush2.msra.mxu0 0.0
        %723 = vmatprep.subr.mxu0 0.0
        %724 = vmatpush2.msra.mxu0 0.0
        %725 = vmatprep.subr.mxu0 0.0
        %726 = vmatpush2.msra.mxu0 0.0
        %727 = vmatprep.subr.mxu0 0.0
        %728 = vmatpush2.msra.mxu0 0.0
        %729 = vmatprep.subr.mxu0 0.0
        %730 = vmatpush2.msra.mxu0 0.0
        %731 = vmatprep.subr.mxu0 0.0
        %732 = vmatpush2.msra.mxu0 0.0
        %733 = vmatprep.subr.mxu0 0.0
        %734 = vmatpush2.msra.mxu0 0.0
        %735 = vmatprep.subr.mxu0 0.0
        %736 = vmatpush2.msra.mxu0 0.0
        %737 = vmatprep.subr.mxu0 0.0
        %738 = vmatpush2.msra.mxu0 0.0
        %739 = vmatprep.subr.mxu0 0.0
        %740 = vmatpush2.msra.mxu0 0.0
        %741 = vmatprep.subr.mxu0 0.0
        %742 = vmatpush2.msra.mxu0 0.0
        %743 = vmatprep.subr.mxu0 0.0
        %744 = vmatpush2.msra.mxu0 0.0
        %745 = vmatprep.mubr.f32.mxu0 0.0
        %746 = vmatmul.mubr.f32.gmra.mxu0 %v679
        %v747 = vpop.f32.mrf.mxu0
        %v748 = vadd.f32 %v676, %v747
        %v749 = vpop.f32.mrf.mxu0
        %750 = vdwg.mxu0
        %v751 = vtanh.pop %v748
        %752 = vst [vmem:[%s403] sm:$0xff] %v751
        %s753 = sand.u32 %s229, 1
        %s754 = scalar_lea.sflag [#allocation4], %s753
        %s755 = sand.u32 %s229, 1
        %s756 = smul.addr %s755, 8
        %s757 = scalar_lea.vmem [#allocation13], %s756
        // Predicated region
        $region81: #{tpu_custom_call.1} parent=55 // pred_check
          %p758 = pneg %p239
        $region82: #{tpu_custom_call.1} parent=55 // pred_check_branch
          %760 = sbr.rel (%p758) target = $region84
        $region83: #{tpu_custom_call.1} parent=55 // pred_region
          %s762 = ssub.s32 128, 128
          %763 = vsyncadd %s754, %s762
          %s764 = smul.addr %s27, 128
          %s765 = scalar_lea.hbm %s9, %s764
          %s767 = sshll.u32 %s757, 4
          %s768 = int_to_ptr.vmem [resolvable:$true] %s767
          %770 = dma.vmem_to_hbm [thread:$0]  %s768, 128, %s765, %s754
        $region84: #{tpu_custom_call.1} parent=55 // pred_fallthru
          _
      $region56: #{tpu_custom_call.1} parent=5 // pred_fallthru
        _
      %p771 = scmp.le.s32.totalorder 2, %s22
      // Predicated region
      $region85: #{tpu_custom_call.1} parent=5 // pred_check
        %p772 = pneg %p771
      $region86: #{tpu_custom_call.1} parent=5 // pred_check_branch
        %774 = sbr.rel (%p772) target = $region88
      $region87: #{tpu_custom_call.1} parent=5 // pred_region
        %s775 = ssub.s32 %s22, 2
        // Predicated region
        $region89: #{tpu_custom_call.1} parent=87 // pred_check
          %p776 = pneg %p245
        $region90: #{tpu_custom_call.1} parent=87 // pred_check_branch
          %778 = sbr.rel (%p776) target = $region92
        $region91: #{tpu_custom_call.1} parent=87 // pred_region
          %s779 = sand.u32 %s230, 1
          %s780 = scalar_lea.sflag [#allocation4], %s779
          %s781 = sand.u32 %s230, 1
          %s782 = smul.addr %s781, 8
          %s783 = scalar_lea.vmem [#allocation13], %s782
          %784 = dma.done %s780, 128
        $region92: #{tpu_custom_call.1} parent=87 // pred_fallthru
          _
      $region88: #{tpu_custom_call.1} parent=5 // pred_fallthru
        _
    $region6: #{tpu_custom_call.1} parent=1 // loop_footer
      %s26 = sadd.s32 1, %s22
    $region7: #{tpu_custom_call.1} parent=1 // loop_footer_branch
      %21 = sbr.rel target = $region3
    $region8: #{tpu_custom_call.1} parent=1 // loop_exit
      _
    %785 = vsyncpa [#allocation3], 1
    %s786 = scalar_lea.sflag [#allocation3], 1
    %787 = vsyncpa %s786, 1
    %788 = vsyncpa [#allocation6], 1
    %789 = vsyncpa [#allocation9], 1
    %790 = vsyncpa [#allocation12], 1
    %791 = vsyncpa [#allocation4], 1
    %s792 = scalar_lea.sflag [#allocation4], 1
    %793 = vsyncpa %s792, 1

</llo_original>
